<compile_context>
chip_gen: v7x
topology: tpu7x:2x2x1
jax: 0.10.0
libtpu: 0.0.40
codegen_flags: <defaults>
</compile_context>

<pallas_src>
import jax
import jax.numpy as jnp
from jax import lax
from jax.experimental import pallas as pl
from jax.experimental.pallas import tpu as pltpu


def _conv_bias_prelu_kernel(p_ref, w_ref, b_ref, a_ref, o_ref):
    # p_ref: (K, TM)    im2col patches, TM lane-dense
    # w_ref: (Cout, K)  conv weights, columns in (dy, dx, cin) order
    # b_ref: (Cout, 1)  conv bias (f32)
    # a_ref: (1,)       PReLU alpha (scalar, SMEM)
    # o_ref: (Cout, TM) conv + bias + PReLU result (pre pixel-shuffle), f32
    acc = jnp.dot(w_ref[...], p_ref[...],
                  preferred_element_type=jnp.float32)        # one MXU matmul
    acc = acc + b_ref[...]                                   # broadcast over lanes
    alpha = a_ref[0]
    o_ref[...] = jnp.where(acc >= 0, acc, alpha * acc).astype(o_ref.dtype)


def upsample_block_forward(x_nchw, w_oihw, bias, alpha, upscale_factor,
                           tile_m=1024, compute_dtype=jnp.bfloat16):
    """Forward of _UpsampleBlock.  x_nchw: (N, C, H, W) -> (N, C', 2H, 2W).

    Note: faithfully replicates the module's hardcoded nn.PixelShuffle(2),
    so the shuffle factor is 2 regardless of `upscale_factor`.
    """
    N, C, H, W = x_nchw.shape
    Cout = C * upscale_factor * upscale_factor
    r = 2                                    # nn.PixelShuffle(2) is hardcoded
    C_ps = Cout // (r * r)
    K = 9 * C
    M = N * H * W
    assert tile_m % 128 == 0

    # ---- glue: layout-preserving im2col -> lane-dense (K, M) patch matrix --
    # Cast to compute dtype FIRST so all wrapper passes + kernel DMA move the
    # narrow dtype.  Transpose only the 1x input to channels-first; stack the
    # 9 taps on a leading axis so the 9x tensor is born in its final layout.
    x_cf = jnp.transpose(x_nchw.astype(compute_dtype), (1, 0, 2, 3))   # (C,N,H,W)
    x_pad = jnp.pad(x_cf, ((0, 0), (0, 0), (1, 1), (1, 1)))            # (C,N,H+2,W+2)
    taps = [x_pad[:, :, dy:dy + H, dx:dx + W]                          # (C,N,H,W)
            for dy in range(3) for dx in range(3)]
    p = jnp.stack(taps, axis=0).reshape(K, M)      # row k = (dy*3+dx)*C + cin

    # Tiny weight permute to the matching (dy, dx, cin) column order.
    w_perm = jnp.transpose(w_oihw.astype(compute_dtype),
                           (0, 2, 3, 1)).reshape(Cout, K)              # (Cout, K)
    b_col = bias.astype(jnp.float32).reshape(Cout, 1)
    a1 = jnp.asarray(alpha, jnp.float32).reshape(1)

    # Big lane tiles amortize per-grid-step overhead; clamp for small inputs.
    tile_m = min(tile_m, pl.cdiv(M, 128) * 128)
    grid_m = pl.cdiv(M, tile_m)        # ragged last tile handled by Pallas masking

    # ---- Pallas kernel: one matmul + bias + PReLU per M-tile ---------------
    out_flat = pl.pallas_call(
        _conv_bias_prelu_kernel,
        out_shape=jax.ShapeDtypeStruct((Cout, M), jnp.float32),
        grid_spec=pltpu.PrefetchScalarGridSpec(
            num_scalar_prefetch=0,
            grid=(grid_m,),
            in_specs=[
                pl.BlockSpec((K, tile_m), lambda i: (0, i)),       # patches
                pl.BlockSpec((Cout, K), lambda i: (0, 0)),         # weights
                pl.BlockSpec((Cout, 1), lambda i: (0, 0)),         # bias
                pl.BlockSpec(memory_space=pltpu.MemorySpace.SMEM),  # alpha
            ],
            out_specs=pl.BlockSpec((Cout, tile_m), lambda i: (0, i)),
        ),
        compiler_params=pltpu.CompilerParams(
            dimension_semantics=("parallel",)),
    )(p, w_perm, b_col, a1)

    # ---- glue: PixelShuffle(2) + return NCHW (single transpose) ------------
    out = out_flat.reshape(C_ps, r, r, N, H, W)                  # cout = (c, i, j)
    out = jnp.transpose(out, (3, 0, 4, 1, 5, 2))                 # (N, C, H, r, W, r)
    return out.reshape(N, C_ps, H * r, W * r)


def _reference_forward(x_nchw, w_oihw, bias, alpha, upscale_factor):
    """Pure-JAX reference mirroring the PyTorch module exactly (f32)."""
    conv = lax.conv_general_dilated(
        x_nchw, w_oihw, window_strides=(1, 1), padding="SAME",
        dimension_numbers=("NCHW", "OIHW", "NCHW"))
    conv = conv + bias.reshape(1, -1, 1, 1)
    N, Cout, H, W = conv.shape
    r = 2
    C_ps = Cout // (r * r)
    y = conv.reshape(N, C_ps, r, r, H, W)
    y = jnp.transpose(y, (0, 1, 4, 2, 5, 3)).reshape(N, C_ps, H * r, W * r)
    return jnp.where(y >= 0, y, alpha * y)


if __name__ == "__main__":
    key = jax.random.PRNGKey(0)
    k_x, k_w, k_b = jax.random.split(key, 3)

    # Small shapes consistent with the module: channels=4, upscale_factor=2.
    N, C, H, W = 2, 4, 16, 16
    upscale_factor = 2
    Cout = C * upscale_factor * upscale_factor                   # 16

    x = jax.random.normal(k_x, (N, C, H, W), dtype=jnp.float32)
    # Deterministic synthetic parameters (not a checkpoint load).
    w = jax.random.normal(k_w, (Cout, C, 3, 3), dtype=jnp.float32) * 0.1
    b = jax.random.normal(k_b, (Cout,), dtype=jnp.float32) * 0.1
    alpha = jnp.float32(0.25)                                    # PReLU default

    fwd = jax.jit(upsample_block_forward,
                  static_argnames=("upscale_factor", "tile_m", "compute_dtype"))

    ref = _reference_forward(x, w, b, alpha, upscale_factor)

    # f32 compute path: tight check against the f32 reference.
    out_f32 = jax.block_until_ready(
        fwd(x, w, b, alpha, upscale_factor=upscale_factor,
            compute_dtype=jnp.float32))
    assert out_f32.shape == (N, C, 2 * H, 2 * W), out_f32.shape
    assert jnp.allclose(out_f32, ref, atol=1e-3, rtol=1e-3), "f32 mismatch vs reference"

    # bf16 compute path (production default): f32 accumulation, loose tolerance.
    out_bf16 = jax.block_until_ready(
        fwd(x, w, b, alpha, upscale_factor=upscale_factor))
    assert out_bf16.shape == (N, C, 2 * H, 2 * W), out_bf16.shape
    assert jnp.allclose(out_bf16, ref, atol=5e-2, rtol=5e-2), "bf16 mismatch vs reference"

    print("KERNEL_OK")
</pallas_src>

<mosaic_0001>
module attributes {stable_mosaic.version = 11 : i64} {
  func.func @_conv_bias_prelu_kernel(%arg0: i32, %arg1: memref<36x512xf32, #tpu.memory_space<vmem>>, %arg2: memref<16x36xf32, #tpu.memory_space<vmem>>, %arg3: memref<16x1xf32, #tpu.memory_space<vmem>>, %arg4: memref<1xf32, #tpu.memory_space<smem>>, %arg5: memref<16x512xf32, #tpu.memory_space<vmem>>) attributes {dimension_semantics = [#tpu.dimension_semantics<parallel>], iteration_bounds = array<i64: 1>, scalar_prefetch = 0 : i64, scratch_operands = 0 : i64, tpu.core_type = #tpu.core_type<tc>, window_params = [{transform_indices = @transform_0, window_bounds = array<i64: 36, 512>}, {pipeline_mode = #tpu.pipeline_mode<synchronous>, transform_indices = @transform_1, window_bounds = array<i64: 16, 36>}, {pipeline_mode = #tpu.pipeline_mode<synchronous>, transform_indices = @transform_2, window_bounds = array<i64: 16, 1>}, {transform_indices = @transform_3, window_bounds = array<i64: 1>}, {transform_indices = @transform_4, window_bounds = array<i64: 16, 512>}]} {
    %c0 = arith.constant 0 : index
    %c0_0 = arith.constant 0 : index
    %0 = vector.load %arg2[%c0, %c0_0] : memref<16x36xf32, #tpu.memory_space<vmem>>, vector<16x36xf32>
    %c0_1 = arith.constant 0 : index
    %c0_2 = arith.constant 0 : index
    %1 = vector.load %arg1[%c0_1, %c0_2] : memref<36x512xf32, #tpu.memory_space<vmem>>, vector<36x512xf32>
    %cst = arith.constant dense<0.000000e+00> : vector<16x512xf32>
    %2 = tpu.matmul %0, %1, %cst {dimension_numbers = #tpu.dot_dimension_numbers<[1], [0], [0], [1], [0, 0, 1, 1], [], []>} : vector<16x36xf32>, vector<36x512xf32>, vector<16x512xf32> -> vector<16x512xf32>
    %c0_3 = arith.constant 0 : index
    %c0_4 = arith.constant 0 : index
    %3 = vector.load %arg3[%c0_3, %c0_4] : memref<16x1xf32, #tpu.memory_space<vmem>>, vector<16x1xf32>
    %4 = vector.broadcast %3 : vector<16x1xf32> to vector<16x512xf32>
    %5 = arith.addf %2, %4 : vector<16x512xf32>
    %c0_5 = arith.constant 0 : index
    %6 = memref.load %arg4[%c0_5] : memref<1xf32, #tpu.memory_space<smem>>
    %cst_6 = arith.constant 0.000000e+00 : f32
    %7 = vector.broadcast %cst_6 : f32 to vector<16x512xf32>
    %8 = arith.cmpf oge, %5, %7 : vector<16x512xf32>
    %9 = vector.broadcast %6 : f32 to vector<16x512xf32>
    %10 = arith.mulf %9, %5 : vector<16x512xf32>
    %11 = arith.select %8, %5, %10 : vector<16x512xi1>, vector<16x512xf32>
    %c0_7 = arith.constant 0 : index
    %c0_8 = arith.constant 0 : index
    %12 = vector.load %arg5[%c0_7, %c0_8] : memref<16x512xf32, #tpu.memory_space<vmem>>, vector<16x512xf32>
    tpu.vector_store %arg5[%c0_7, %c0_8], %11 {strides = array<i32>} : memref<16x512xf32, #tpu.memory_space<vmem>>, vector<16x512xf32>,
    return
  }
  func.func @transform_0(%arg0: i32) -> (i32, i32) {
    %c0_i32 = arith.constant 0 : i32
    %c0_i32_0 = arith.constant 0 : i32
    return %c0_i32, %arg0 : i32, i32
  }
  func.func @transform_1(%arg0: i32) -> (i32, i32) {
    %c0_i32 = arith.constant 0 : i32
    %c0_i32_0 = arith.constant 0 : i32
    %c0_i32_1 = arith.constant 0 : i32
    return %c0_i32, %c0_i32_0 : i32, i32
  }
  func.func @transform_2(%arg0: i32) -> (i32, i32) {
    %c0_i32 = arith.constant 0 : i32
    %c0_i32_0 = arith.constant 0 : i32
    %c0_i32_1 = arith.constant 0 : i32
    return %c0_i32, %c0_i32_0 : i32, i32
  }
  func.func @transform_3(%arg0: i32) -> i32 {
    %c0_i32 = arith.constant 0 : i32
    %c0_i32_0 = arith.constant 0 : i32
    return %c0_i32 : i32
  }
  func.func @transform_4(%arg0: i32) -> (i32, i32) {
    %c0_i32 = arith.constant 0 : i32
    %c0_i32_0 = arith.constant 0 : i32
    return %c0_i32, %arg0 : i32, i32
  }
}

</mosaic_0001>

<llo_original>
// kernel: upsample_block_forward.1
$region0: #{upsample_block_forward.1}
  #allocation0 [shape = 'u32[]', space=smem, size = 0x4, offset = 0x4, fixed_abs, tag = 'smem constant byte address 0x4 - core index']
  #allocation1 [shape = 'u32[144,128]{1,0:T(1,128)}', space=vmem, size = 0x12000, scoped, tag = 'internal scratch']
  #allocation2 [shape = 'f32[1]{0:T(128)S(6)}', space=smem, size = 0x200, scoped, tag = 'scoped memory for upsample_block_forward.1']
  %s0 = inlined_call_operand.vmem [shape: f32[36,512], index: 0, kind: input, shape index: {}]
  %s1 = inlined_call_operand.vmem [shape: f32[16,36], index: 1, kind: input, shape index: {}]
  %s2 = inlined_call_operand.vmem [shape: f32[16,1], index: 2, kind: input, shape index: {}]
  %s3 = inlined_call_operand.<no memory space> [shape: f32[1], index: 3, kind: input, shape index: {}]
  %s4 = inlined_call_operand.vmem [shape: f32[16,512], index: 4, kind: output, shape index: {}]
  %s5 = sld [smem:[#allocation0]]
  $region26: #{upsample_block_forward.1} parent=0
    _
  %s7 = ssub.s32 1, %s5
  %s8 = scalar_select 0, %s7, %s5
  %9 = sst [smem:[#allocation2]] %s3
  // Predicated region
  $region2: #{upsample_block_forward.1} parent=0 // pred_check
    _
  $region3: #{upsample_block_forward.1} parent=0 // pred_check_branch
    %11 = sbr.rel (0) target = $region5
  $region4: #{upsample_block_forward.1} parent=0 // pred_region
    _
  $region5: #{upsample_block_forward.1} parent=0 // pred_fallthru
    _
  // Predicated region
  $region6: #{upsample_block_forward.1} parent=0 // pred_check
    _
  $region7: #{upsample_block_forward.1} parent=0 // pred_check_branch
    %13 = sbr.rel (0) target = $region9
  $region8: #{upsample_block_forward.1} parent=0 // pred_region
    _
  $region9: #{upsample_block_forward.1} parent=0 // pred_fallthru
    _
  // Predicated region
  $region10: #{upsample_block_forward.1} parent=0 // pred_check
    _
  $region11: #{upsample_block_forward.1} parent=0 // pred_check_branch
    %15 = sbr.rel (0) target = $region13
  $region12: #{upsample_block_forward.1} parent=0 // pred_region
    _
  $region13: #{upsample_block_forward.1} parent=0 // pred_fallthru
    _
  // Predicated region
  $region14: #{upsample_block_forward.1} parent=0 // pred_check
    _
  $region15: #{upsample_block_forward.1} parent=0 // pred_check_branch
    %17 = sbr.rel (0) target = $region17
  $region16: #{upsample_block_forward.1} parent=0 // pred_region
    _
  $region17: #{upsample_block_forward.1} parent=0 // pred_fallthru
    _
  %v18 = vld [vmem:[%s1] sm:$0xff]
  %v19 = vld [vmem:[%s1 + $0x8] sm:$0xff]
  %v20 = vld [vmem:[%s0] sm:$0xff]
  %v21 = vld [vmem:[%s0 + $0x8] sm:$0xff]
  %v22 = vld [vmem:[%s0 + $0x10] sm:$0xff]
  %v23 = vld [vmem:[%s0 + $0x18] sm:$0xff]
  %v24 = vld [vmem:[%s0 + $0x20] sm:$0xff]
  %v25 = vld [vmem:[%s0 + $0x28] sm:$0xff]
  %v26 = vld [vmem:[%s0 + $0x30] sm:$0xff]
  %v27 = vld [vmem:[%s0 + $0x38] sm:$0xff]
  %v28 = vld [vmem:[%s0 + $0x40] sm:$0xff]
  %v29 = vld [vmem:[%s0 + $0x48] sm:$0xff]
  %v30 = vld [vmem:[%s0 + $0x50] sm:$0xff]
  %v31 = vld [vmem:[%s0 + $0x58] sm:$0xff]
  %v32 = vld [vmem:[%s0 + $0x60] sm:$0xff]
  %v33 = vld [vmem:[%s0 + $0x68] sm:$0xff]
  %v34 = vld [vmem:[%s0 + $0x70] sm:$0xff]
  %v35 = vld [vmem:[%s0 + $0x78] sm:$0xff]
  %v36 = vld [vmem:[%s0 + $0x80] sm:$0xf]
  %v37 = vld [vmem:[%s0 + $0x88] sm:$0xf]
  %v38 = vld [vmem:[%s0 + $0x90] sm:$0xf]
  %v39 = vld [vmem:[%s0 + $0x98] sm:$0xf]
  %v40 = vld [vmem:[%s2] sm:$0xff]
  %v41 = vld [vmem:[%s2 + $0x8] sm:$0xff]
  %43 = vset.pattern.permute.xlu0 0
  %44 = vperm.xlu0 %43, %v40
  %v45 = vpop.permute.xlu0 %44
  %48 = vset.pattern.permute.xlu0 0
  %49 = vperm.xlu0 %48, %v41
  %v50 = vpop.permute.xlu0 %49
  %vm52 = vcmask 293888
  %v54 = vsel %vm52, %v18, 0
  %v57 = vsel %vm52, %v19, 0
  %vm59 = vcmask 1043456
  %v61 = vsel %vm59, %v36, 0
  %v64 = vsel %vm59, %v37, 0
  %v67 = vsel %vm59, %v38, 0
  %v70 = vsel %vm59, %v39, 0
  %72 = vmatprep.subr.mxu0 %v21
  %73 = vmatpush1.msra.mxu0 %v20
  %74 = vmatprep.subr.mxu0 %v25
  %75 = vmatpush1.msra.mxu0 %v24
  %76 = vmatprep.subr.mxu0 %v29
  %77 = vmatpush1.msra.mxu0 %v28
  %78 = vmatprep.subr.mxu0 %v33
  %79 = vmatpush1.msra.mxu0 %v32
  %80 = vmatprep.subr.mxu0 %v64
  %81 = vmatpush1.msra.mxu0 %v61
  %82 = vmatprep.subr.mxu0 0.0
  %83 = vmatpush1.msra.mxu0 0.0
  %84 = vmatprep.subr.mxu0 0.0
  %85 = vmatpush1.msra.mxu0 0.0
  %86 = vmatprep.subr.mxu0 0.0
  %87 = vmatpush1.msra.mxu0 0.0
  %88 = vmatprep.subr.mxu0 0.0
  %89 = vmatpush1.msra.mxu0 0.0
  %90 = vmatprep.subr.mxu0 0.0
  %91 = vmatpush1.msra.mxu0 0.0
  %92 = vmatprep.subr.mxu0 0.0
  %93 = vmatpush1.msra.mxu0 0.0
  %94 = vmatprep.subr.mxu0 0.0
  %95 = vmatpush1.msra.mxu0 0.0
  %96 = vmatprep.subr.mxu0 0.0
  %97 = vmatpush1.msra.mxu0 0.0
  %98 = vmatprep.subr.mxu0 0.0
  %99 = vmatpush1.msra.mxu0 0.0
  %100 = vmatprep.subr.mxu0 0.0
  %101 = vmatpush1.msra.mxu0 0.0
  %102 = vmatprep.subr.mxu0 0.0
  %103 = vmatpush1.msra.mxu0 0.0
  %104 = vmatprep.subr.mxu0 0.0
  %105 = vmatpush1.msra.mxu0 0.0
  %106 = vmatprep.subr.mxu0 0.0
  %107 = vmatpush1.msra.mxu0 0.0
  %108 = vmatprep.subr.mxu0 0.0
  %109 = vmatpush1.msra.mxu0 0.0
  %110 = vmatprep.subr.mxu0 0.0
  %111 = vmatpush1.msra.mxu0 0.0
  %112 = vmatprep.subr.mxu0 0.0
  %113 = vmatpush1.msra.mxu0 0.0
  %114 = vmatprep.subr.mxu0 0.0
  %115 = vmatpush1.msra.mxu0 0.0
  %116 = vmatprep.subr.mxu0 0.0
  %117 = vmatpush1.msra.mxu0 0.0
  %118 = vmatprep.subr.mxu0 0.0
  %119 = vmatpush1.msra.mxu0 0.0
  %120 = vmatprep.subr.mxu0 0.0
  %121 = vmatpush1.msra.mxu0 0.0
  %122 = vmatprep.subr.mxu0 0.0
  %123 = vmatpush1.msra.mxu0 0.0
  %124 = vmatprep.subr.mxu0 0.0
  %125 = vmatpush1.msra.mxu0 0.0
  %126 = vmatprep.subr.mxu0 0.0
  %127 = vmatpush1.msra.mxu0 0.0
  %128 = vmatprep.subr.mxu0 0.0
  %129 = vmatpush1.msra.mxu0 0.0
  %130 = vmatprep.subr.mxu0 0.0
  %131 = vmatpush1.msra.mxu0 0.0
  %132 = vmatprep.subr.mxu0 0.0
  %133 = vmatpush1.msra.mxu0 0.0
  %134 = vmatprep.subr.mxu0 0.0
  %135 = vmatpush1.msra.mxu0 0.0
  %136 = vmatprep.mubr.f32.mxu0 0.0
  %137 = vmatmul.mubr.f32.gmra.mrb[0].mxu0 %v54
  %v138 = vpop.f32.mrb[0].mxu0
  %v139 = vadd.f32 %v45, %v138
  %v140 = vpop.f32.mrb[0].mxu0
  %v141 = vadd.f32 %v45, %v140
  %142 = vmatprep.mubr.f32.mxu0 0.0
  %143 = vmatmul.mubr.f32.gmra.mrb[0].mxu0 %v57
  %v144 = vpop.f32.mrb[0].mxu0
  %v145 = vadd.f32 %v50, %v144
  %v146 = vpop.f32.mrb[0].mxu0
  %v147 = vadd.f32 %v50, %v146
  %148 = vdwg.mxu0
  %149 = vmatprep.subr.mxu0 %v23
  %150 = vmatpush1.msra.mxu0 %v22
  %151 = vmatprep.subr.mxu0 %v27
  %152 = vmatpush1.msra.mxu0 %v26
  %153 = vmatprep.subr.mxu0 %v31
  %154 = vmatpush1.msra.mxu0 %v30
  %155 = vmatprep.subr.mxu0 %v35
  %156 = vmatpush1.msra.mxu0 %v34
  %157 = vmatprep.subr.mxu0 %v70
  %158 = vmatpush1.msra.mxu0 %v67
  %159 = vmatprep.subr.mxu0 0.0
  %160 = vmatpush1.msra.mxu0 0.0
  %161 = vmatprep.subr.mxu0 0.0
  %162 = vmatpush1.msra.mxu0 0.0
  %163 = vmatprep.subr.mxu0 0.0
  %164 = vmatpush1.msra.mxu0 0.0
  %165 = vmatprep.subr.mxu0 0.0
  %166 = vmatpush1.msra.mxu0 0.0
  %167 = vmatprep.subr.mxu0 0.0
  %168 = vmatpush1.msra.mxu0 0.0
  %169 = vmatprep.subr.mxu0 0.0
  %170 = vmatpush1.msra.mxu0 0.0
  %171 = vmatprep.subr.mxu0 0.0
  %172 = vmatpush1.msra.mxu0 0.0
  %173 = vmatprep.subr.mxu0 0.0
  %174 = vmatpush1.msra.mxu0 0.0
  %175 = vmatprep.subr.mxu0 0.0
  %176 = vmatpush1.msra.mxu0 0.0
  %177 = vmatprep.subr.mxu0 0.0
  %178 = vmatpush1.msra.mxu0 0.0
  %179 = vmatprep.subr.mxu0 0.0
  %180 = vmatpush1.msra.mxu0 0.0
  %181 = vmatprep.subr.mxu0 0.0
  %182 = vmatpush1.msra.mxu0 0.0
  %183 = vmatprep.subr.mxu0 0.0
  %184 = vmatpush1.msra.mxu0 0.0
  %185 = vmatprep.subr.mxu0 0.0
  %186 = vmatpush1.msra.mxu0 0.0
  %187 = vmatprep.subr.mxu0 0.0
  %188 = vmatpush1.msra.mxu0 0.0
  %189 = vmatprep.subr.mxu0 0.0
  %190 = vmatpush1.msra.mxu0 0.0
  %191 = vmatprep.subr.mxu0 0.0
  %192 = vmatpush1.msra.mxu0 0.0
  %193 = vmatprep.subr.mxu0 0.0
  %194 = vmatpush1.msra.mxu0 0.0
  %195 = vmatprep.subr.mxu0 0.0
  %196 = vmatpush1.msra.mxu0 0.0
  %197 = vmatprep.subr.mxu0 0.0
  %198 = vmatpush1.msra.mxu0 0.0
  %199 = vmatprep.subr.mxu0 0.0
  %200 = vmatpush1.msra.mxu0 0.0
  %201 = vmatprep.subr.mxu0 0.0
  %202 = vmatpush1.msra.mxu0 0.0
  %203 = vmatprep.subr.mxu0 0.0
  %204 = vmatpush1.msra.mxu0 0.0
  %205 = vmatprep.subr.mxu0 0.0
  %206 = vmatpush1.msra.mxu0 0.0
  %207 = vmatprep.subr.mxu0 0.0
  %208 = vmatpush1.msra.mxu0 0.0
  %209 = vmatprep.subr.mxu0 0.0
  %210 = vmatpush1.msra.mxu0 0.0
  %211 = vmatprep.subr.mxu0 0.0
  %212 = vmatpush1.msra.mxu0 0.0
  %213 = vmatprep.mubr.f32.mxu0 0.0
  %214 = vmatmul.mubr.f32.gmra.mrb[0].mxu0 %v54
  %v215 = vpop.f32.mrb[0].mxu0
  %v216 = vadd.f32 %v45, %v215
  %v217 = vpop.f32.mrb[0].mxu0
  %v218 = vadd.f32 %v45, %v217
  %219 = vmatprep.mubr.f32.mxu0 0.0
  %220 = vmatmul.mubr.f32.gmra.mrb[0].mxu0 %v57
  %v221 = vpop.f32.mrb[0].mxu0
  %v222 = vadd.f32 %v50, %v221
  %v223 = vpop.f32.mrb[0].mxu0
  %v224 = vadd.f32 %v50, %v223
  %225 = vdwg.mxu0
  %s226 = sld [smem:[#allocation2]]
  %vm227 = vcmp.ge.f32.partialorder %v139, 0.0
  %vm228 = vcmp.ge.f32.partialorder %v141, 0.0
  %vm229 = vcmp.ge.f32.partialorder %v216, 0.0
  %vm230 = vcmp.ge.f32.partialorder %v218, 0.0
  %vm231 = vcmp.ge.f32.partialorder %v145, 0.0
  %vm232 = vcmp.ge.f32.partialorder %v147, 0.0
  %vm233 = vcmp.ge.f32.partialorder %v222, 0.0
  %vm234 = vcmp.ge.f32.partialorder %v224, 0.0
  %v235 = vstv %s226
  %v236 = vmul.f32 %v235, %v139
  %v237 = vmul.f32 %v235, %v141
  %v238 = vmul.f32 %v235, %v216
  %v239 = vmul.f32 %v235, %v218
  %v240 = vmul.f32 %v235, %v145
  %v241 = vmul.f32 %v235, %v147
  %v242 = vmul.f32 %v235, %v222
  %v243 = vmul.f32 %v235, %v224
  %v244 = vsel %vm227, %v139, %v236
  %v245 = vsel %vm228, %v141, %v237
  %v246 = vsel %vm229, %v216, %v238
  %v247 = vsel %vm230, %v218, %v239
  %v248 = vsel %vm231, %v145, %v240
  %v249 = vsel %vm232, %v147, %v241
  %v250 = vsel %vm233, %v222, %v242
  %v251 = vsel %vm234, %v224, %v243
  %252 = vst [vmem:[%s4] sm:$0xff] %v244
  %253 = vst [vmem:[%s4 + $0x8] sm:$0xff] %v245
  %254 = vst [vmem:[%s4 + $0x10] sm:$0xff] %v246
  %255 = vst [vmem:[%s4 + $0x18] sm:$0xff] %v247
  %256 = vst [vmem:[%s4 + $0x20] sm:$0xff] %v248
  %257 = vst [vmem:[%s4 + $0x28] sm:$0xff] %v249
  %258 = vst [vmem:[%s4 + $0x30] sm:$0xff] %v250
  %259 = vst [vmem:[%s4 + $0x38] sm:$0xff] %v251
  // Predicated region
  $region18: #{upsample_block_forward.1} parent=0 // pred_check
    _
  $region19: #{upsample_block_forward.1} parent=0 // pred_check_branch
    %261 = sbr.rel (0) target = $region21
  $region20: #{upsample_block_forward.1} parent=0 // pred_region
    _
  $region21: #{upsample_block_forward.1} parent=0 // pred_fallthru
    _
  // Predicated region
  $region22: #{upsample_block_forward.1} parent=0 // pred_check
    _
  $region23: #{upsample_block_forward.1} parent=0 // pred_check_branch
    %263 = sbr.rel (0) target = $region25
  $region24: #{upsample_block_forward.1} parent=0 // pred_region
    _
  $region25: #{upsample_block_forward.1} parent=0 // pred_fallthru
    _

</llo_original>
